<compile_context>
chip_gen: v5e
topology: v5e:2x2
jax: 0.10.0
libtpu: 0.0.40
codegen_flags: <defaults>
</compile_context>

<pallas_src>
import jax
import jax.numpy as jnp
from jax.experimental import pallas as pl
from jax.experimental.pallas import tpu as pltpu

NEG = -1e30  # finite "-inf" sentinel (plain Python float; never captured by the kernel)


def _round_up(n, m):
    return ((n + m - 1) // m) * m


# ---------------------- Pallas kernel: linear + log_softmax + emission gather -------------
def infer_logsoftmax_emit_kernel(x_ref, w_ref, b_ref, ext_ref, o_ref):
    # x_ref:   (1, TT, F_pad)  bf16   activation rows for one (batch, time-tile)
    # w_ref:   (F_pad, V_pad)  bf16   resident weight
    # b_ref:   (1, V_pad)      f32    bias; padded vocab lanes pre-set to -1e30 (mask fold)
    # ext_ref: (1, 1, S_pad)   int32  extended (blank-interleaved) labels; pad lanes = -1
    # o_ref:   (1, TT, S_pad)  bf16   emission log-probs for the extended labels
    x = x_ref[0]
    w = w_ref[...]
    z = jnp.dot(x, w, preferred_element_type=jnp.float32) + b_ref[...]
    # log_softmax over the vocab (lane) axis; padded lanes already hold ~-1e30 via the bias
    m = jnp.max(z, axis=-1, keepdims=True)
    zc = z - m
    lse = jnp.log(jnp.sum(jnp.exp(zc), axis=-1, keepdims=True))
    logp = zc - lse                                           # (TT, V_pad) f32

    # Fused CTC emission gather: one-hot[v, s] = (v == ext[s]); gather == logp @ one-hot.
    # Padded ext lanes are -1 -> all-zero columns -> gathered value 0 (never read by CTC).
    ext = ext_ref[0]                                          # (1, S_pad) int32
    v_iota = jax.lax.broadcasted_iota(jnp.int32, (w.shape[1], ext.shape[1]), 0)
    onehot = (v_iota == ext).astype(jnp.bfloat16)             # (V_pad, S_pad)
    o_ref[0] = jnp.dot(logp.astype(jnp.bfloat16), onehot,
                       preferred_element_type=jnp.float32).astype(o_ref.dtype)


def _pick_time_tile(T):
    """Row (time) tile per batch: multiples of 16 (bf16 packs 2 rows/sublane)."""
    T16 = _round_up(T, 16)
    if T16 <= 256:
        return T16, T16            # single time tile per batch element
    # Large T: 256-row tiles keep the double-buffered blocks modest on v5e/v7x
    # (v6e's 128 MiB VMEM could go to 512 for a few extra % of HBM roofline).
    TT = 256
    return TT, _round_up(T, TT)


def infer_log_softmax_emissions(logits, ext, w_p, b_p):
    """logits: [B, T, F] f32, ext: [B, S] int32 extended labels,
    w_p: [F_pad, V_pad] bf16 (pre-padded), b_p: [1, V_pad] f32 (pad lanes = -1e30).
    Returns emission log-probs [B, T_pad, S_pad] bf16 (only [:, :, :S] is meaningful)."""
    B, T, F = logits.shape
    F_pad, V_pad = w_p.shape
    S = ext.shape[1]
    S_pad = _round_up(S, 128)
    TT, T_pad = _pick_time_tile(T)
    n_t = T_pad // TT

    # Pad activations once (lane-dense); padded rows flow through CTC's t-mask downstream,
    # so no post-kernel slice over the big tensor is needed.
    x_p = jnp.zeros((B, T_pad, F_pad), jnp.bfloat16).at[:, :T, :F].set(
        logits.astype(jnp.bfloat16))
    ext_p = jnp.full((B, 1, S_pad), -1, jnp.int32).at[:, 0, :S].set(ext)

    # Deeper input buffering only pays off once there are enough time tiles to pipeline.
    x_spec_kwargs = {}
    if n_t >= 4:
        x_spec_kwargs = dict(pipeline_mode=pl.Buffered(3))

    # VMEM budget: raise the scoped limit only when the footprint needs it (keeps the
    # v5e 16 MiB / v7x 32 MiB defaults untouched at small sizes).
    per_step = TT * F_pad * 2 + TT * S_pad * 2            # x block + out block (bf16)
    resident = F_pad * V_pad * 2 + V_pad * 4 + S_pad * 4  # weight + bias + ext
    live = TT * V_pad * 4 + V_pad * S_pad * 4             # z/logp + one-hot intermediates
    est_vmem = 2 * per_step + 2 * resident + live
    vmem_limit = None
    if est_vmem > 12 * 1024 * 1024:
        vmem_limit = int(min(2 * est_vmem, 48 * 1024 * 1024))  # retune per generation

    out = pl.pallas_call(
        infer_logsoftmax_emit_kernel,
        out_shape=jax.ShapeDtypeStruct((B, T_pad, S_pad), jnp.bfloat16),
        grid=(B, n_t),
        in_specs=[
            pl.BlockSpec((1, TT, F_pad), lambda b, t: (b, t, 0), **x_spec_kwargs),
            pl.BlockSpec((F_pad, V_pad), lambda b, t: (0, 0)),   # loop-invariant weight
            pl.BlockSpec((1, V_pad), lambda b, t: (0, 0)),       # loop-invariant bias
            pl.BlockSpec((1, 1, S_pad), lambda b, t: (b, 0, 0)),  # per-batch ext labels
        ],
        out_specs=pl.BlockSpec((1, TT, S_pad), lambda b, t: (b, t, 0)),
        compiler_params=pltpu.CompilerParams(
            dimension_semantics=("parallel", "parallel"),
            vmem_limit_bytes=vmem_limit),
    )(x_p, w_p, b_p, ext_p)
    return out


# ------------------------------ CTC forward (JAX glue) -----------------------------------
def ctc_neg_log_likelihood(logp_ext, ext, input_lengths, label_lengths):
    """Standard CTC forward (alpha) recursion on pre-gathered emission log-probs.
    logp_ext: [B, T, S] f32 (S = 2L+1, blank-interleaved), ext: [B, S] int32."""
    B, Tt, S = logp_ext.shape

    s_idx = jnp.arange(S)
    is_label = (s_idx % 2 == 1)[None, :]
    ext_m2 = jnp.concatenate([jnp.zeros((B, 2), jnp.int32), ext[:, :-2]], axis=1)
    can_skip = is_label & (ext != ext_m2)

    alpha0 = jnp.full((B, S), NEG, jnp.float32)
    alpha0 = alpha0.at[:, 0].set(logp_ext[:, 0, 0])
    alpha0 = alpha0.at[:, 1].set(jnp.where(label_lengths > 0, logp_ext[:, 0, 1], NEG))

    def step(alpha_prev, t):
        a1 = jnp.concatenate([jnp.full((B, 1), NEG, jnp.float32), alpha_prev[:, :-1]], axis=1)
        a2 = jnp.concatenate([jnp.full((B, 2), NEG, jnp.float32), alpha_prev[:, :-2]], axis=1)
        a2 = jnp.where(can_skip, a2, NEG)
        stacked = jnp.stack([alpha_prev, a1, a2], axis=0)
        m = jnp.max(stacked, axis=0)
        lse = m + jnp.log(jnp.sum(jnp.exp(stacked - m), axis=0))
        alpha_new = lse + logp_ext[:, t, :]
        valid = (t < input_lengths)[:, None]          # padded time rows are masked here
        return jnp.where(valid, alpha_new, alpha_prev), None

    alpha, _ = jax.lax.scan(step, alpha0, jnp.arange(1, Tt))

    last = (2 * label_lengths).astype(jnp.int32)
    a_end = jnp.take_along_axis(alpha, last[:, None], axis=1)[:, 0]
    a_end1 = jnp.take_along_axis(alpha, jnp.maximum(last - 1, 0)[:, None], axis=1)[:, 0]
    a_end1 = jnp.where(label_lengths > 0, a_end1, NEG)   # empty-label edge case
    m = jnp.maximum(a_end, a_end1)
    log_lik = m + jnp.log(jnp.exp(a_end - m) + jnp.exp(a_end1 - m))
    return -jnp.sum(log_lik)


# --------------------------------- NasModel.forward ---------------------------------------
def make_padded_params(F, V, key):
    """Stand-in self.infer parameters, pre-padded / bf16-cast ONCE at init (hoisted out of
    the jitted forward). Padded vocab bias lanes carry -1e30 (mask folded into bias)."""
    F_pad, V_pad = _round_up(F, 128), _round_up(V, 128)
    w = jax.random.normal(key, (F, V), jnp.float32) * (1.0 / jnp.sqrt(F))
    w_p = jnp.zeros((F_pad, V_pad), jnp.bfloat16).at[:F, :V].set(w.astype(jnp.bfloat16))
    b_p = jnp.full((1, V_pad), NEG, jnp.float32).at[0, :V].set(jnp.zeros((V,), jnp.float32))
    return w_p, b_p


@jax.jit
def nas_model_forward(logits, labels_padded, input_lengths, label_lengths, w_p, b_p):
    # NOTE: the descending-length torch.sort + index_select in the PyTorch module exists
    # only for warp-ctc packed-sequence handling; the batched CTC below is order-invariant,
    # so that reorder (an extra HBM pass over logits) is dropped — numerically identical.
    B, L = labels_padded.shape
    S = 2 * L + 1
    # extended label sequence: blank, y1, blank, y2, ..., blank  (blank = 0)
    ext = jnp.zeros((B, S), jnp.int32).at[:, 1::2].set(labels_padded.astype(jnp.int32))

    # netout = log_softmax(self.infer(logits), dim=2), with the CTC emission gather fused
    # into the kernel epilogue (full [B,T,V] log-probs never hit HBM).
    emis = infer_log_softmax_emissions(logits, ext, w_p, b_p)   # [B, T_pad, S_pad] bf16
    logp_ext = emis[:, :, :S].astype(jnp.float32)

    lens_o = input_lengths  # TODO(synk): real supernet may subsample time; identity here.

    # loss = self.loss_fn(netout, labels, lens_o, label_lengths)  (CTC numerator path)
    return ctc_neg_log_likelihood(logp_ext, ext, lens_o, label_lengths)


if __name__ == "__main__":
    B, T, F, V, L = 2, 8, 32, 32, 5          # batch, time, feature, vocab (blank=0), labels
    key = jax.random.PRNGKey(0)
    k1, k2, k3 = jax.random.split(key, 3)
    logits = jax.random.normal(k1, (B, T, F), jnp.float32)
    labels_padded = jax.random.randint(k2, (B, L), 1, V, dtype=jnp.int32)   # 0 is blank
    input_lengths = jnp.array([6, 8], dtype=jnp.int32)
    label_lengths = jnp.array([5, 3], dtype=jnp.int32)

    w_p, b_p = make_padded_params(F, V, k3)
    loss = nas_model_forward(logits, labels_padded, input_lengths, label_lengths, w_p, b_p)
    loss = jax.block_until_ready(loss)
    assert not bool(jnp.isnan(loss)), "nan in loss."
    print("KERNEL_OK")
</pallas_src>

<mosaic_0001>
module attributes {stable_mosaic.version = 11 : i64} {
  func.func @infer_logsoftmax_emit_kernel(%arg0: i32, %arg1: i32, %arg2: memref<1x16x128xbf16, #tpu.memory_space<vmem>>, %arg3: memref<128x128xbf16, #tpu.memory_space<vmem>>, %arg4: memref<1x128xf32, #tpu.memory_space<vmem>>, %arg5: memref<1x1x128xi32, #tpu.memory_space<vmem>>, %arg6: memref<1x16x128xbf16, #tpu.memory_space<vmem>>) attributes {dimension_semantics = [#tpu.dimension_semantics<parallel>, #tpu.dimension_semantics<parallel>], iteration_bounds = array<i64: 2, 1>, scalar_prefetch = 0 : i64, scratch_operands = 0 : i64, tpu.core_type = #tpu.core_type<tc>, window_params = [{transform_indices = @transform_0, window_bounds = array<i64: 1, 16, 128>}, {pipeline_mode = #tpu.pipeline_mode<synchronous>, transform_indices = @transform_1, window_bounds = array<i64: 128, 128>}, {pipeline_mode = #tpu.pipeline_mode<synchronous>, transform_indices = @transform_2, window_bounds = array<i64: 1, 128>}, {transform_indices = @transform_3, window_bounds = array<i64: 1, 1, 128>}, {transform_indices = @transform_4, window_bounds = array<i64: 1, 16, 128>}]} {
    %c0 = arith.constant 0 : index
    %c0_0 = arith.constant 0 : index
    %c0_1 = arith.constant 0 : index
    %0 = vector.load %arg2[%c0, %c0_0, %c0_1] : memref<1x16x128xbf16, #tpu.memory_space<vmem>>, vector<1x16x128xbf16>
    %1 = vector.shape_cast %0 : vector<1x16x128xbf16> to vector<16x128xbf16>
    %c0_2 = arith.constant 0 : index
    %c0_3 = arith.constant 0 : index
    %2 = vector.load %arg3[%c0_2, %c0_3] : memref<128x128xbf16, #tpu.memory_space<vmem>>, vector<128x128xbf16>
    %cst = arith.constant dense<0.000000e+00> : vector<16x128xf32>
    %3 = tpu.matmul %1, %2, %cst {dimension_numbers = #tpu.dot_dimension_numbers<[1], [0], [0], [1], [0, 0, 1, 1], [], []>} : vector<16x128xbf16>, vector<128x128xbf16>, vector<16x128xf32> -> vector<16x128xf32>
    %c0_4 = arith.constant 0 : index
    %c0_5 = arith.constant 0 : index
    %4 = vector.load %arg4[%c0_4, %c0_5] : memref<1x128xf32, #tpu.memory_space<vmem>>, vector<1x128xf32>
    %5 = vector.broadcast %4 : vector<1x128xf32> to vector<16x128xf32>
    %6 = arith.addf %3, %5 : vector<16x128xf32>
    %cst_6 = arith.constant dense<0xFF800000> : vector<16xf32>
    %7 = vector.multi_reduction <maximumf>, %6, %cst_6 [1] : vector<16x128xf32> to vector<16xf32>
    %8 = vector.shape_cast %7 : vector<16xf32> to vector<16x1xf32>
    %9 = vector.broadcast %8 : vector<16x1xf32> to vector<16x128xf32>
    %10 = arith.subf %6, %9 : vector<16x128xf32>
    %11 = math.exp %10 : vector<16x128xf32>
    %cst_7 = arith.constant dense<0.000000e+00> : vector<16xf32>
    %12 = vector.multi_reduction <add>, %11, %cst_7 [1] : vector<16x128xf32> to vector<16xf32>
    %13 = vector.shape_cast %12 : vector<16xf32> to vector<16x1xf32>
    %14 = math.log %13 : vector<16x1xf32>
    %15 = vector.broadcast %14 : vector<16x1xf32> to vector<16x128xf32>
    %16 = arith.subf %10, %15 : vector<16x128xf32>
    %c0_8 = arith.constant 0 : index
    %c0_9 = arith.constant 0 : index
    %c0_10 = arith.constant 0 : index
    %17 = vector.load %arg5[%c0_8, %c0_9, %c0_10] : memref<1x1x128xi32, #tpu.memory_space<vmem>>, vector<1x1x128xi32>
    %18 = vector.shape_cast %17 : vector<1x1x128xi32> to vector<1x128xi32>
    %19 = tpu.iota {dimensions = array<i32: 0>} : vector<128x128xi32>
    %20 = vector.broadcast %18 : vector<1x128xi32> to vector<128x128xi32>
    %21 = arith.cmpi eq, %19, %20 : vector<128x128xi32>
    %22 = arith.extui %21 : vector<128x128xi1> to vector<128x128xi32>
    %23 = arith.sitofp %22 : vector<128x128xi32> to vector<128x128xf32>
    %24 = arith.truncf %23 : vector<128x128xf32> to vector<128x128xbf16>
    %25 = arith.truncf %16 : vector<16x128xf32> to vector<16x128xbf16>
    %cst_11 = arith.constant dense<0.000000e+00> : vector<16x128xf32>
    %26 = tpu.matmul %25, %24, %cst_11 {dimension_numbers = #tpu.dot_dimension_numbers<[1], [0], [0], [1], [0, 0, 1, 1], [], []>} : vector<16x128xbf16>, vector<128x128xbf16>, vector<16x128xf32> -> vector<16x128xf32>
    %27 = arith.truncf %26 : vector<16x128xf32> to vector<16x128xbf16>
    %c0_12 = arith.constant 0 : index
    %c0_13 = arith.constant 0 : index
    %c0_14 = arith.constant 0 : index
    %28 = vector.load %arg6[%c0_12, %c0_13, %c0_14] : memref<1x16x128xbf16, #tpu.memory_space<vmem>>, vector<1x16x128xbf16>
    %29 = vector.shape_cast %28 : vector<1x16x128xbf16> to vector<16x128xbf16>
    %30 = vector.shape_cast %27 : vector<16x128xbf16> to vector<1x16x128xbf16>
    tpu.vector_store %arg6[%c0_12, %c0_13, %c0_14], %30 {strides = array<i32>} : memref<1x16x128xbf16, #tpu.memory_space<vmem>>, vector<1x16x128xbf16>,
    return
  }
  func.func @transform_0(%arg0: i32, %arg1: i32) -> (i32, i32, i32) {
    %c0_i32 = arith.constant 0 : i32
    %c0_i32_0 = arith.constant 0 : i32
    return %arg0, %arg1, %c0_i32 : i32, i32, i32
  }
  func.func @transform_1(%arg0: i32, %arg1: i32) -> (i32, i32) {
    %c0_i32 = arith.constant 0 : i32
    %c0_i32_0 = arith.constant 0 : i32
    %c0_i32_1 = arith.constant 0 : i32
    return %c0_i32, %c0_i32_0 : i32, i32
  }
  func.func @transform_2(%arg0: i32, %arg1: i32) -> (i32, i32) {
    %c0_i32 = arith.constant 0 : i32
    %c0_i32_0 = arith.constant 0 : i32
    %c0_i32_1 = arith.constant 0 : i32
    return %c0_i32, %c0_i32_0 : i32, i32
  }
  func.func @transform_3(%arg0: i32, %arg1: i32) -> (i32, i32, i32) {
    %c0_i32 = arith.constant 0 : i32
    %c0_i32_0 = arith.constant 0 : i32
    %c0_i32_1 = arith.constant 0 : i32
    return %arg0, %c0_i32, %c0_i32_0 : i32, i32, i32
  }
  func.func @transform_4(%arg0: i32, %arg1: i32) -> (i32, i32, i32) {
    %c0_i32 = arith.constant 0 : i32
    %c0_i32_0 = arith.constant 0 : i32
    return %arg0, %arg1, %c0_i32 : i32, i32, i32
  }
}

</mosaic_0001>

<llo_original>
// kernel: nas_model_forward.1
$region0: #{nas_model_forward.1}
  #allocation0 [shape = 'u32[]', space=smem, size = 0x4, offset = 0x4, fixed_abs, tag = 'smem constant byte address 0x4 - core index']
  #allocation1 [shape = 'u32[72,128]{1,0:T(1,128)}', space=vmem, size = 0x9000, scoped, tag = 'internal scratch']
  %s0 = inlined_call_operand.vmem [shape: bf16[2,16,128], index: 0, kind: input, shape index: {}]
  %s1 = inlined_call_operand.vmem [shape: bf16[128,128], index: 1, kind: input, shape index: {}]
  %s2 = inlined_call_operand.vmem [shape: f32[1,128], index: 2, kind: input, shape index: {}]
  %s3 = inlined_call_operand.vmem [shape: s32[2,1,128], index: 3, kind: input, shape index: {}]
  %s4 = inlined_call_operand.vmem [shape: bf16[2,16,128], index: 4, kind: output, shape index: {}]
  %s5 = sld [smem:[#allocation0]]
  $region49: #{nas_model_forward.1} parent=0
    _
  %s7 = ssub.s32 1, %s5
  %s8 = scalar_select 0, %s7, %s5
  loop: start=0, step=1, limit=4
  $region2: #{nas_model_forward.1} parent=0 // loop_pre_header
    _
  $region3: #{nas_model_forward.1} parent=0 // loop_header
    %s10 = sphi 0, %s14
    %p11 = scmp.ge.s32.totalorder %s10, 4
    %s17 = sphi 0, %s29
    %s18 = sphi 0, %s25
    %s19 = sphi 0, %s17
    %s20 = sphi 0, %s18
    %s21 = sphi 0, %s19
    %s22 = sphi 0, %s20
    %s34 = sphi 0, %s36
    %s37 = sphi 0, %s34
    %s38 = sphi 0, %s37
    %s54 = sphi 0, %s38
    %s58 = sphi 0, %s58
    %s60 = sphi 0, %s58
    %s61 = sphi 0, %s60
    %s75 = sphi 0, %s61
    %s79 = sphi 0, %s79
    %s81 = sphi 0, %s79
    %s82 = sphi 0, %s81
    %s96 = sphi 0, %s82
    %s102 = sphi 0, %s104
    %s105 = sphi 0, %s102
    %s106 = sphi 0, %s105
    %s122 = sphi 0, %s106
    %s130 = sphi 0, %s132
    %s133 = sphi 0, %s130
    %s134 = sphi 0, %s133
    %s150 = sphi 0, %s134
  $region4: #{nas_model_forward.1} parent=0 // loop_header_branch
    %13 = sbr.rel (%p11) target = $region8
  $region5: #{nas_model_forward.1} parent=0 // loop_body
    %s15 = ssub.s32 %s10, 1
    %s16 = ssub.s32 %s10, 2
    %s23 = sadd.s32 1, %s18
    %p24 = scmp.ge.s32.totalorder %s23, 1
    %s25 = scalar_select %p24, 0, %s23
    %s26 = sadd.s32 1, %s17
    %s27 = scalar_select %p24, %s26, %s17
    %p28 = scmp.ge.s32.totalorder %s27, 2
    %s29 = scalar_select %p28, 0, %s27
    %s30 = ssub.s32 %s17, %s29
    %s31 = ssub.s32 %s18, %s25
    %s32 = sor.u32 %s30, %s31
    %p33 = scmp.eq.s32.totalorder %s32, 0
    %s35 = sadd.s32 %s34, 1
    %s36 = scalar_select %p33, %s34, %s35
    %p39 = pneg %p33
    %p40 = scmp.eq.s32.totalorder %s10, 1
    %p41 = por %p39, %p40
    %p42 = scmp.ne.s32.totalorder %s34, %s37
    %p43 = scmp.eq.s32.totalorder %s10, 0
    %p44 = por %p42, %p43
    %p45 = scmp.ne.s32.totalorder %s34, %s37
    %p46 = scmp.eq.s32.totalorder %s15, 1
    %p47 = por %p45, %p46
    %p48 = scmp.ne.s32.totalorder %s37, %s38
    %p49 = scmp.eq.s32.totalorder %s15, 0
    %p50 = por %p48, %p49
    %p51 = scmp.ne.s32.totalorder %s37, %s38
    %p52 = scmp.eq.s32.totalorder %s16, 1
    %p53 = por %p51, %p52
    %p55 = scmp.ne.s32.totalorder %s38, %s54
    %p56 = scmp.eq.s32.totalorder %s16, 0
    %p57 = por %p55, %p56
    %s59 = sadd.s32 %s58, 1
    %p62 = scmp.eq.s32.totalorder %s10, 1
    %p63 = scmp.ne.s32.totalorder %s58, %s60
    %p64 = scmp.eq.s32.totalorder %s10, 0
    %p65 = por %p63, %p64
    %p66 = scmp.ne.s32.totalorder %s58, %s60
    %p67 = scmp.eq.s32.totalorder %s15, 1
    %p68 = por %p66, %p67
    %p69 = scmp.ne.s32.totalorder %s60, %s61
    %p70 = scmp.eq.s32.totalorder %s15, 0
    %p71 = por %p69, %p70
    %p72 = scmp.ne.s32.totalorder %s60, %s61
    %p73 = scmp.eq.s32.totalorder %s16, 1
    %p74 = por %p72, %p73
    %p76 = scmp.ne.s32.totalorder %s61, %s75
    %p77 = scmp.eq.s32.totalorder %s16, 0
    %p78 = por %p76, %p77
    %s80 = sadd.s32 %s79, 1
    %p83 = scmp.eq.s32.totalorder %s10, 1
    %p84 = scmp.ne.s32.totalorder %s79, %s81
    %p85 = scmp.eq.s32.totalorder %s10, 0
    %p86 = por %p84, %p85
    %p87 = scmp.ne.s32.totalorder %s79, %s81
    %p88 = scmp.eq.s32.totalorder %s15, 1
    %p89 = por %p87, %p88
    %p90 = scmp.ne.s32.totalorder %s81, %s82
    %p91 = scmp.eq.s32.totalorder %s15, 0
    %p92 = por %p90, %p91
    %p93 = scmp.ne.s32.totalorder %s81, %s82
    %p94 = scmp.eq.s32.totalorder %s16, 1
    %p95 = por %p93, %p94
    %p97 = scmp.ne.s32.totalorder %s82, %s96
    %p98 = scmp.eq.s32.totalorder %s16, 0
    %p99 = por %p97, %p98
    %s100 = ssub.s32 %s17, %s29
    %p101 = scmp.eq.s32.totalorder %s100, 0
    %s103 = sadd.s32 %s102, 1
    %s104 = scalar_select %p101, %s102, %s103
    %p107 = pneg %p101
    %p108 = scmp.eq.s32.totalorder %s10, 1
    %p109 = por %p107, %p108
    %p110 = scmp.ne.s32.totalorder %s102, %s105
    %p111 = scmp.eq.s32.totalorder %s10, 0
    %p112 = por %p110, %p111
    %p113 = scmp.ne.s32.totalorder %s102, %s105
    %p114 = scmp.eq.s32.totalorder %s15, 1
    %p115 = por %p113, %p114
    %p116 = scmp.ne.s32.totalorder %s105, %s106
    %p117 = scmp.eq.s32.totalorder %s15, 0
    %p118 = por %p116, %p117
    %p119 = scmp.ne.s32.totalorder %s105, %s106
    %p120 = scmp.eq.s32.totalorder %s16, 1
    %p121 = por %p119, %p120
    %p123 = scmp.ne.s32.totalorder %s106, %s122
    %p124 = scmp.eq.s32.totalorder %s16, 0
    %p125 = por %p123, %p124
    %s126 = ssub.s32 %s17, %s29
    %s127 = ssub.s32 %s18, %s25
    %s128 = sor.u32 %s126, %s127
    %p129 = scmp.eq.s32.totalorder %s128, 0
    %s131 = sadd.s32 %s130, 1
    %s132 = scalar_select %p129, %s130, %s131
    %p135 = pneg %p129
    %p136 = scmp.eq.s32.totalorder %s10, 1
    %p137 = por %p135, %p136
    %p138 = scmp.ne.s32.totalorder %s130, %s133
    %p139 = scmp.eq.s32.totalorder %s10, 0
    %p140 = por %p138, %p139
    %p141 = scmp.ne.s32.totalorder %s130, %s133
    %p142 = scmp.eq.s32.totalorder %s15, 1
    %p143 = por %p141, %p142
    %p144 = scmp.ne.s32.totalorder %s133, %s134
    %p145 = scmp.eq.s32.totalorder %s15, 0
    %p146 = por %p144, %p145
    %p147 = scmp.ne.s32.totalorder %s133, %s134
    %p148 = scmp.eq.s32.totalorder %s16, 1
    %p149 = por %p147, %p148
    %p151 = scmp.ne.s32.totalorder %s134, %s150
    %p152 = scmp.eq.s32.totalorder %s16, 0
    %p153 = por %p151, %p152
    %p154 = scmp.le.s32.totalorder 1, %s10
    %p155 = scmp.lt.s32.totalorder %s10, 3
    %p156 = pnand %p154, %p155
    %p157 = pneg %p156
    // Predicated region
    $region9: #{nas_model_forward.1} parent=5 // pred_check
      _
    $region10: #{nas_model_forward.1} parent=5 // pred_check_branch
      %159 = sbr.rel (%p156) target = $region12
    $region11: #{nas_model_forward.1} parent=5 // pred_region
      %s160 = ssub.s32 %s10, 1
      // Predicated region
      $region13: #{nas_model_forward.1} parent=11 // pred_check
        %p161 = pneg %p71
      $region14: #{nas_model_forward.1} parent=11 // pred_check_branch
        %163 = sbr.rel (%p161) target = $region16
      $region15: #{nas_model_forward.1} parent=11 // pred_region
        _
      $region16: #{nas_model_forward.1} parent=11 // pred_fallthru
        _
      // Predicated region
      $region17: #{nas_model_forward.1} parent=11 // pred_check
        %p164 = pneg %p92
      $region18: #{nas_model_forward.1} parent=11 // pred_check_branch
        %166 = sbr.rel (%p164) target = $region20
      $region19: #{nas_model_forward.1} parent=11 // pred_region
        _
      $region20: #{nas_model_forward.1} parent=11 // pred_fallthru
        _
    $region12: #{nas_model_forward.1} parent=5 // pred_fallthru
      _
    %p167 = scmp.lt.s32.totalorder %s10, 2
    // Predicated region
    $region21: #{nas_model_forward.1} parent=5 // pred_check
      %p168 = pneg %p167
    $region22: #{nas_model_forward.1} parent=5 // pred_check_branch
      %170 = sbr.rel (%p168) target = $region24
    $region23: #{nas_model_forward.1} parent=5 // pred_region
      // Predicated region
      $region25: #{nas_model_forward.1} parent=23 // pred_check
        %p171 = pneg %p44
      $region26: #{nas_model_forward.1} parent=23 // pred_check_branch
        %173 = sbr.rel (%p171) target = $region28
      $region27: #{nas_model_forward.1} parent=23 // pred_region
        %s174 = smul.u32 2, %s18
        %p175 = scmp.lt.s32.totalorder %s17, 1
        %s176 = scalar_select %p175, %s17, 1
        %p177 = scmp.lt.s32.totalorder %s174, 1
        %s178 = scalar_select %p177, %s174, 1
        %s179 = smul.addr %s176, 2
        %s180 = sadd.s32 %s178, %s179
        %s181 = smul.addr %s180, 4
        %s182 = scalar_lea.vmem %s0, %s181
        %s183 = smul.u32 2, %s18
      $region28: #{nas_model_forward.1} parent=23 // pred_fallthru
        _
      // Predicated region
      $region29: #{nas_model_forward.1} parent=23 // pred_check
        %p184 = pneg %p112
      $region30: #{nas_model_forward.1} parent=23 // pred_check_branch
        %186 = sbr.rel (%p184) target = $region32
      $region31: #{nas_model_forward.1} parent=23 // pred_region
        %p187 = scmp.lt.s32.totalorder %s17, 1
        %s188 = scalar_select %p187, %s17, 1
        %s189 = scalar_lea.vmem %s3, %s188
      $region32: #{nas_model_forward.1} parent=23 // pred_fallthru
        _
    $region24: #{nas_model_forward.1} parent=5 // pred_fallthru
      _
    %p190 = scmp.le.s32.totalorder 1, %s10
    %p191 = scmp.lt.s32.totalorder %s10, 3
    %p192 = pnand %p190, %p191
    %p193 = pneg %p192
    // Predicated region
    $region33: #{nas_model_forward.1} parent=5 // pred_check
      _
    $region34: #{nas_model_forward.1} parent=5 // pred_check_branch
      %195 = sbr.rel (%p192) target = $region36
    $region35: #{nas_model_forward.1} parent=5 // pred_region
      %s196 = ssub.s32 %s10, 1
      %s197 = smul.u32 2, %s20
      %p198 = scmp.lt.s32.totalorder %s19, 1
      %s199 = scalar_select %p198, %s19, 1
      %p200 = scmp.lt.s32.totalorder %s197, 1
      %s201 = scalar_select %p200, %s197, 1
      %s202 = smul.addr %s199, 2
      %s203 = sadd.s32 %s201, %s202
      %s204 = smul.addr %s203, 4
      %s205 = scalar_lea.vmem %s0, %s204
      %p206 = pneg %p50
      %p207 = pneg %p47
      %p208 = pneg %p71
      %p209 = pneg %p68
      %p210 = pneg %p92
      %p211 = pneg %p89
      %p212 = scmp.lt.s32.totalorder %s19, 1
      %s213 = scalar_select %p212, %s19, 1
      %s214 = scalar_lea.vmem %s3, %s213
      %p215 = pneg %p118
      %p216 = pneg %p115
      %p217 = pneg %p146
      %p218 = pneg %p143
      %s219 = smul.u32 2, %s20
      %p220 = scmp.lt.s32.totalorder %s19, 1
      %s221 = scalar_select %p220, %s19, 1
      %p222 = scmp.lt.s32.totalorder %s219, 1
      %s223 = scalar_select %p222, %s219, 1
      %s224 = smul.addr %s221, 2
      %s225 = sadd.s32 %s223, %s224
      %s226 = smul.addr %s225, 4
      %s227 = scalar_lea.vmem %s4, %s226
      %s228 = smul.u32 2, %s20
      %p229 = scmp.lt.s32.totalorder %s19, 1
      %s230 = scalar_select %p229, %s19, 1
      %p231 = scmp.lt.s32.totalorder %s228, 1
      %s232 = scalar_select %p231, %s228, 1
      %s233 = smul.addr %s230, 2
      %s234 = sadd.s32 %s232, %s233
      %s235 = smul.addr %s234, 4
      %s236 = scalar_lea.vmem %s0, %s235
      %s237 = smul.u32 2, %s20
      %p238 = scmp.lt.s32.totalorder %s19, 1
      %s239 = scalar_select %p238, %s19, 1
      %s240 = scalar_lea.vmem %s3, %s239
      %s241 = smul.u32 2, %s20
      %p242 = scmp.lt.s32.totalorder %s19, 1
      %s243 = scalar_select %p242, %s19, 1
      %p244 = scmp.lt.s32.totalorder %s241, 1
      %s245 = scalar_select %p244, %s241, 1
      %s246 = smul.addr %s243, 2
      %s247 = sadd.s32 %s245, %s246
      %s248 = smul.addr %s247, 4
      %s249 = scalar_lea.vmem %s4, %s248
      %s250 = smul.u32 2, %s20
      %v251 = vld [vmem:[%s236] sm:$0xf]
      %v252 = vld [vmem:[%s236 + $0x4] sm:$0xf]
      %v253 = vld [vmem:[%s1] sm:$0xf]
      %v254 = vld [vmem:[%s1 + $0x4] sm:$0xf]
      %v255 = vld [vmem:[%s1 + $0x8] sm:$0xf]
      %v256 = vld [vmem:[%s1 + $0xc] sm:$0xf]
      %v257 = vld [vmem:[%s1 + $0x10] sm:$0xf]
      %v258 = vld [vmem:[%s1 + $0x14] sm:$0xf]
      %v259 = vld [vmem:[%s1 + $0x18] sm:$0xf]
      %v260 = vld [vmem:[%s1 + $0x1c] sm:$0xf]
      %v261 = vld [vmem:[%s1 + $0x20] sm:$0xf]
      %v262 = vld [vmem:[%s1 + $0x24] sm:$0xf]
      %v263 = vld [vmem:[%s1 + $0x28] sm:$0xf]
      %v264 = vld [vmem:[%s1 + $0x2c] sm:$0xf]
      %v265 = vld [vmem:[%s1 + $0x30] sm:$0xf]
      %v266 = vld [vmem:[%s1 + $0x34] sm:$0xf]
      %v267 = vld [vmem:[%s1 + $0x38] sm:$0xf]
      %v268 = vld [vmem:[%s1 + $0x3c] sm:$0xf]
      %v269 = vld [vmem:[%s2] sm:$0x1]
      %v271 = vperm.slane %v269, 0
      %v275 = vunpack.c.l.b16 %v251
      %v276 = vunpack.c.l.b16 %v252
      %v277 = vpack.c.b16 %v276, %v275
      %v295 = vunpack.c.l.b16 %v253
      %v296 = vunpack.c.l.b16 %v254
      %v297 = vunpack.c.l.b16 %v255
      %v298 = vunpack.c.l.b16 %v256
      %v299 = vunpack.c.l.b16 %v257
      %v300 = vunpack.c.l.b16 %v258
      %v301 = vunpack.c.l.b16 %v259
      %v302 = vunpack.c.l.b16 %v260
      %v303 = vunpack.c.l.b16 %v261
      %v304 = vunpack.c.l.b16 %v262
      %v305 = vunpack.c.l.b16 %v263
      %v306 = vunpack.c.l.b16 %v264
      %v307 = vunpack.c.l.b16 %v265
      %v308 = vunpack.c.l.b16 %v266
      %v309 = vunpack.c.l.b16 %v267
      %v310 = vunpack.c.l.b16 %v268
      %v311 = vpack.c.b16 %v296, %v295
      %v312 = vpack.c.b16 %v298, %v297
      %v313 = vpack.c.b16 %v300, %v299
      %v314 = vpack.c.b16 %v302, %v301
      %v315 = vpack.c.b16 %v304, %v303
      %v316 = vpack.c.b16 %v306, %v305
      %v317 = vpack.c.b16 %v308, %v307
      %v318 = vpack.c.b16 %v310, %v309
      %327 = vmatpush.bf16.msra.mxu0 %v318
      %328 = vmatpush.bf16.msra.mxu0 %v317
      %329 = vmatpush.bf16.msra.mxu0 %v316
      %330 = vmatpush.bf16.msra.mxu0 %v315
      %331 = vmatpush.bf16.msra.mxu0 %v314
      %332 = vmatpush.bf16.msra.mxu0 %v313
      %333 = vmatpush.bf16.msra.mxu0 %v312
      %334 = vmatpush.bf16.msra.mxu0 %v311
      %335 = vmatmul.bf16.gmra.mxu0 %v277
      %v336 = vpop.f32.mrf.mxu0
      %v337 = vadd.f32 %v271, %v336
      %v338 = vpop.f32.mrf.mxu0
      %v339 = vadd.f32 %v271, %v338
      %340 = vdwg.mxu0
      %341 = vmax.xlane.f32.xlu0 %v337
      %v342 = vpop.xlane.xlu0 %341
      %343 = vmax.xlane.f32.xlu0 %v339
      %v344 = vpop.xlane.xlu0 %343
      %v345 = vsub.f32 %v337, %v342
      %v346 = vsub.f32 %v339, %v344
      %v347 = vmul.f32 %v345, 1.442695
      %v348 = vpow.pop %v347
      %v349 = vmul.f32 %v346, 1.442695
      %v350 = vpow.pop %v349
      %351 = vadd.xlane.f32.xlu0 %v348
      %v352 = vpop.xlane.xlu0 %351
      %353 = vadd.xlane.f32.xlu0 %v350
      %v354 = vpop.xlane.xlu0 %353
      %v355 = vlog2.pop %v352
      %v356 = vmul.f32 %v355, 0.6931472
      %v357 = vlog2.pop %v354
      %v358 = vmul.f32 %v357, 0.6931472
      %v359 = vsub.f32 %v345, %v356
      %v360 = vsub.f32 %v346, %v358
      %v361 = vld [vmem:[%s240] sm:$0x1]
      %v362 = vlaneseq
      %v363 = vshrl.u32 %v362, 7
      %v364 = vadd.s32 %v363, 8
      %v365 = vadd.s32 %v363, 16
      %v366 = vadd.s32 %v363, 24
      %v367 = vadd.s32 %v363, 32
      %v368 = vadd.s32 %v363, 40
      %v369 = vadd.s32 %v363, 48
      %v370 = vadd.s32 %v363, 56
      %v371 = vadd.s32 %v363, 64
      %v372 = vadd.s32 %v363, 72
      %v373 = vadd.s32 %v363, 80
      %v374 = vadd.s32 %v363, 88
      %v375 = vadd.s32 %v363, 96
      %v376 = vadd.s32 %v363, 104
      %v377 = vadd.s32 %v363, 112
      %v378 = vadd.s32 %v363, 120
      %v379 = vperm.slane %v361, 0
      %vm380 = vcmp.eq.s32.totalorder %v363, %v379
      %vm381 = vcmp.eq.s32.totalorder %v364, %v379
      %vm382 = vcmp.eq.s32.totalorder %v365, %v379
      %vm383 = vcmp.eq.s32.totalorder %v366, %v379
      %vm384 = vcmp.eq.s32.totalorder %v367, %v379
      %vm385 = vcmp.eq.s32.totalorder %v368, %v379
      %vm386 = vcmp.eq.s32.totalorder %v369, %v379
      %vm387 = vcmp.eq.s32.totalorder %v370, %v379
      %vm388 = vcmp.eq.s32.totalorder %v371, %v379
      %vm389 = vcmp.eq.s32.totalorder %v372, %v379
      %vm390 = vcmp.eq.s32.totalorder %v373, %v379
      %vm391 = vcmp.eq.s32.totalorder %v374, %v379
      %vm392 = vcmp.eq.s32.totalorder %v375, %v379
      %vm393 = vcmp.eq.s32.totalorder %v376, %v379
      %vm394 = vcmp.eq.s32.totalorder %v377, %v379
      %vm395 = vcmp.eq.s32.totalorder %v378, %v379
      %v396 = vsel %vm380, 1, 0
      %v397 = vsel %vm381, 1, 0
      %v398 = vsel %vm382, 1, 0
      %v399 = vsel %vm383, 1, 0
      %v400 = vsel %vm384, 1, 0
      %v401 = vsel %vm385, 1, 0
      %v402 = vsel %vm386, 1, 0
      %v403 = vsel %vm387, 1, 0
      %v404 = vsel %vm388, 1, 0
      %v405 = vsel %vm389, 1, 0
      %v406 = vsel %vm390, 1, 0
      %v407 = vsel %vm391, 1, 0
      %v408 = vsel %vm392, 1, 0
      %v409 = vsel %vm393, 1, 0
      %v410 = vsel %vm394, 1, 0
      %v411 = vsel %vm395, 1, 0
      %v412 = vcvt.s32.f32 %v396
      %v413 = vcvt.s32.f32 %v397
      %v414 = vcvt.s32.f32 %v398
      %v415 = vcvt.s32.f32 %v399
      %v416 = vcvt.s32.f32 %v400
      %v417 = vcvt.s32.f32 %v401
      %v418 = vcvt.s32.f32 %v402
      %v419 = vcvt.s32.f32 %v403
      %v420 = vcvt.s32.f32 %v404
      %v421 = vcvt.s32.f32 %v405
      %v422 = vcvt.s32.f32 %v406
      %v423 = vcvt.s32.f32 %v407
      %v424 = vcvt.s32.f32 %v408
      %v425 = vcvt.s32.f32 %v409
      %v426 = vcvt.s32.f32 %v410
      %v427 = vcvt.s32.f32 %v411
      %v428 = vpack.c.bf16 %v413, %v412
      %v429 = vpack.c.bf16 %v415, %v414
      %v430 = vpack.c.bf16 %v417, %v416
      %v431 = vpack.c.bf16 %v419, %v418
      %v432 = vpack.c.bf16 %v421, %v420
      %v433 = vpack.c.bf16 %v423, %v422
      %v434 = vpack.c.bf16 %v425, %v424
      %v435 = vpack.c.bf16 %v427, %v426
      %v436 = vpack.c.bf16 %v360, %v359
      %437 = vmatpush.bf16.msra.mxu0 %v435
      %438 = vmatpush.bf16.msra.mxu0 %v434
      %439 = vmatpush.bf16.msra.mxu0 %v433
      %440 = vmatpush.bf16.msra.mxu0 %v432
      %441 = vmatpush.bf16.msra.mxu0 %v431
      %442 = vmatpush.bf16.msra.mxu0 %v430
      %443 = vmatpush.bf16.msra.mxu0 %v429
      %444 = vmatpush.bf16.msra.mxu0 %v428
      %445 = vmatmul.bf16.gmra.mxu0 %v436
      %v446 = vpop.f32.mrf.mxu0
      %v447 = vadd.f32 0.0, %v446
      %v448 = vpop.f32.mrf.mxu0
      %v449 = vadd.f32 0.0, %v448
      %450 = vdwg.mxu0
      %v451 = vpack.c.bf16 %v447, %v447
      %v452 = vpack.c.bf16 %v449, %v449
      %453 = vst [vmem:[%s249] sm:$0xf] %v451
      %454 = vst [vmem:[%s249 + $0x4] sm:$0xf] %v452
      %s455 = smul.u32 2, %s20
      %p456 = scmp.lt.s32.totalorder %s19, 1
      %s457 = scalar_select %p456, %s19, 1
      %p458 = scmp.lt.s32.totalorder %s455, 1
      %s459 = scalar_select %p458, %s455, 1
      %s460 = smul.addr %s457, 2
      %s461 = sadd.s32 %s459, %s460
      %s462 = smul.addr %s461, 4
      %s463 = scalar_lea.vmem %s4, %s462
      // Predicated region
      $region37: #{nas_model_forward.1} parent=35 // pred_check
        %p464 = pneg %p143
      $region38: #{nas_model_forward.1} parent=35 // pred_check_branch
        %466 = sbr.rel (%p464) target = $region40
      $region39: #{nas_model_forward.1} parent=35 // pred_region
        %s467 = smul.u32 2, %s20
      $region40: #{nas_model_forward.1} parent=35 // pred_fallthru
        _
    $region36: #{nas_model_forward.1} parent=5 // pred_fallthru
      _
    %p468 = scmp.le.s32.totalorder 2, %s10
    // Predicated region
    $region41: #{nas_model_forward.1} parent=5 // pred_check
      %p469 = pneg %p468
    $region42: #{nas_model_forward.1} parent=5 // pred_check_branch
      %471 = sbr.rel (%p469) target = $region44
    $region43: #{nas_model_forward.1} parent=5 // pred_region
      %s472 = ssub.s32 %s10, 2
      // Predicated region
      $region45: #{nas_model_forward.1} parent=43 // pred_check
        %p473 = pneg %p149
      $region46: #{nas_model_forward.1} parent=43 // pred_check_branch
        %475 = sbr.rel (%p473) target = $region48
      $region47: #{nas_model_forward.1} parent=43 // pred_region
        %s476 = smul.u32 2, %s22
        %p477 = scmp.lt.s32.totalorder %s21, 1
        %s478 = scalar_select %p477, %s21, 1
        %p479 = scmp.lt.s32.totalorder %s476, 1
        %s480 = scalar_select %p479, %s476, 1
        %s481 = smul.addr %s478, 2
        %s482 = sadd.s32 %s480, %s481
        %s483 = smul.addr %s482, 4
        %s484 = scalar_lea.vmem %s4, %s483
      $region48: #{nas_model_forward.1} parent=43 // pred_fallthru
        _
    $region44: #{nas_model_forward.1} parent=5 // pred_fallthru
      _
  $region6: #{nas_model_forward.1} parent=0 // loop_footer
    %s14 = sadd.s32 1, %s10
  $region7: #{nas_model_forward.1} parent=0 // loop_footer_branch
    %9 = sbr.rel target = $region3
  $region8: #{nas_model_forward.1} parent=0 // loop_exit
    _

</llo_original>
